<compile_context>
chip_gen: v7x
topology: tpu7x:2x2x1
jax: 0.10.0
libtpu: 0.0.40
codegen_flags: <defaults>
</compile_context>

<pallas_src>
import functools

import jax
import jax.numpy as jnp
from jax import lax
from jax.experimental import pallas as pl
from jax.experimental.pallas import tpu as pltpu

_MAX_TM = 512                 # batch rows / tile (multiple of 16 -> bf16 packing)
_MAX_TN = 512                 # output features / tile (multiple of 128 lanes)
_MAX_TK = 2048                # contraction chunk; K <= _MAX_TK -> single K block
_VMEM_LIMIT_BYTES = 48 * 1024 * 1024   # ~10 MiB working set; < v7x 64 MiB phys
_SCALAR_LANES = 128
_SCALAR_TILE_ROWS = 2048      # (2048, 128) f32 tile = 1 MiB


def _round_up(x, m):
    return ((x + m - 1) // m) * m


# ---------------------------------------------------------------------------
# Fast path: in_features == out_features == 1  ->  y = x * w + b   (VPU FMA)
# ---------------------------------------------------------------------------
def _linear_scalar_kernel(w_ref, b_ref, x_ref, o_ref):
    # w_ref, b_ref: (1,) scalars in SMEM; x_ref / o_ref: (tr, 128) VMEM tiles.
    o_ref[...] = x_ref[...] * w_ref[0] + b_ref[0]


def _linear_scalar(x, weight, bias):
    n = x.shape[0]
    w1 = weight.reshape(1).astype(jnp.float32)
    b1 = bias.reshape(1).astype(jnp.float32)

    # Lane-dense layout: an (N, 1) column uses 1/128 lanes per vreg and
    # compiles to masked partial stores, so present the element stream as
    # (rows, 128) tiles instead (pad is trivial for the 1->1 regression case).
    n_pad = _round_up(n, 8 * _SCALAR_LANES)
    xf = x.reshape(-1).astype(jnp.float32)
    if n_pad != n:
        xf = jnp.pad(xf, (0, n_pad - n))
    rows = n_pad // _SCALAR_LANES
    x2 = xf.reshape(rows, _SCALAR_LANES)
    tr = rows if rows <= _SCALAR_TILE_ROWS else _SCALAR_TILE_ROWS

    out2 = pl.pallas_call(
        _linear_scalar_kernel,
        out_shape=jax.ShapeDtypeStruct((rows, _SCALAR_LANES), jnp.float32),
        grid_spec=pltpu.PrefetchScalarGridSpec(
            num_scalar_prefetch=0,
            grid=(pl.cdiv(rows, tr),),
            in_specs=[
                pl.BlockSpec(memory_space=pltpu.MemorySpace.SMEM),
                pl.BlockSpec(memory_space=pltpu.MemorySpace.SMEM),
                pl.BlockSpec((tr, _SCALAR_LANES), lambda i: (i, 0)),
            ],
            out_specs=pl.BlockSpec((tr, _SCALAR_LANES), lambda i: (i, 0)),
        ),
        compiler_params=pltpu.CompilerParams(
            dimension_semantics=("parallel",),
            vmem_limit_bytes=_VMEM_LIMIT_BYTES,
        ),
        cost_estimate=pl.CostEstimate(
            flops=2 * n, transcendentals=0, bytes_accessed=4 * (2 * n + 2)),
    )(w1, b1, x2)
    return out2.reshape(-1)[:n].reshape(n, 1)


# ---------------------------------------------------------------------------
# General path: tiled MXU matmul, weight delivered as (K, M) tiles.
# ---------------------------------------------------------------------------
def _linear_tiled_kernel(x_ref, w_ref, b_ref, o_ref, *, k_rem):
    k_idx = pl.program_id(2)
    nk = pl.num_programs(2)

    # o_ref's index map ignores the K axis -> the output block is VMEM
    # resident across K and doubles as the f32 accumulator.
    @pl.when(k_idx == 0)
    def _init():
        o_ref[...] = jnp.zeros_like(o_ref)

    x = x_ref[...]
    if k_rem:
        # Static: K does not divide tk. Zero the ragged tail columns of the
        # final K block (the weight is zero-padded there), so the out-of-range
        # contribution is exactly 0 regardless of what the stale VMEM held.
        col = lax.broadcasted_iota(jnp.int32, x.shape, dimension=1)
        limit = jnp.where(k_idx == nk - 1, k_rem, x.shape[1])
        x = jnp.where(col < limit, x, jnp.zeros_like(x))

    # (tm, tk) @ (tk, tn) -> clean MXU push, no per-step transpose.
    o_ref[...] += jnp.dot(x, w_ref[...], preferred_element_type=jnp.float32)

    # Add the bias exactly once, on the final K step.
    @pl.when(k_idx == nk - 1)
    def _finalize():
        o_ref[...] += b_ref[...]


def _linear_tiled(x, weight, bias, compute_dtype):
    n, k = x.shape
    m, _ = weight.shape

    tm = n if n <= _MAX_TM else _MAX_TM
    tn = m if m <= _MAX_TN else _MAX_TN
    if k <= _MAX_TK:
        tk, k_rem, k_pad = k, 0, k
    else:
        tk = _MAX_TK
        k_rem = k % tk
        k_pad = _round_up(k, tk) if k_rem else k

    # No forced f32 upcast and no padding/copy of the activation matrix.
    x_c = x if x.dtype == compute_dtype else x.astype(compute_dtype)
    # One-time transpose+cast of the small weight to (K, M).
    w_t = weight.T.astype(compute_dtype)
    if k_pad != k:
        # Zero-pad only the (small) weight along K; x's ragged K tail is
        # masked in-kernel.
        w_t = jnp.pad(w_t, ((0, k_pad - k), (0, 0)))
    b2 = bias.astype(jnp.float32).reshape(1, m)

    grid = (pl.cdiv(n, tm), pl.cdiv(m, tn), pl.cdiv(k, tk))

    out = pl.pallas_call(
        functools.partial(_linear_tiled_kernel, k_rem=k_rem),
        out_shape=jax.ShapeDtypeStruct((n, m), jnp.float32),
        grid_spec=pltpu.PrefetchScalarGridSpec(
            num_scalar_prefetch=0,
            grid=grid,
            in_specs=[
                pl.BlockSpec((tm, tk), lambda i, j, kk: (i, kk)),
                pl.BlockSpec((tk, tn), lambda i, j, kk: (kk, j)),
                pl.BlockSpec((1, tn), lambda i, j, kk: (0, j)),
            ],
            out_specs=pl.BlockSpec((tm, tn), lambda i, j, kk: (i, j)),
        ),
        compiler_params=pltpu.CompilerParams(
            dimension_semantics=("parallel", "parallel", "arbitrary"),
            vmem_limit_bytes=_VMEM_LIMIT_BYTES,
        ),
        cost_estimate=pl.CostEstimate(
            flops=2 * n * k * m,
            transcendentals=0,
            bytes_accessed=(n * k * x_c.dtype.itemsize
                            + k_pad * m * w_t.dtype.itemsize
                            + 4 * m + 4 * n * m),
        ),
    )(x_c, w_t, b2)
    return out


def linear_reg_forward(x, weight, bias, compute_dtype=jnp.bfloat16):
    """y = x @ weight.T + bias  (PyTorch nn.Linear semantics).

    x:      (N, in_features)
    weight: (out_features, in_features)  (PyTorch layout)
    bias:   (out_features,)

    The general path feeds `compute_dtype` (bf16 by default; MXU-native on
    v5e/v6e/v7x) with f32 accumulation and f32 output. Pass
    compute_dtype=jnp.float32 for exact f32 numerics.
    """
    n, k = x.shape
    m, k2 = weight.shape
    assert k == k2 and bias.shape == (m,)
    if k == 1 and m == 1:
        # The module's actual use case (LinearReg(1, 1)): pure VPU broadcast
        # FMA, no MXU, no padding of K/M up to the MXU granule.
        return _linear_scalar(x, weight, bias)
    # TODO(synk): shapes with out_features == 1 and tiny K (regression heads)
    # still take the MXU path; a dedicated VPU reduction path would avoid the
    # K/M padding to MXU granules for those.
    return _linear_tiled(x, weight, bias, compute_dtype)


if __name__ == "__main__":
    # --- The module as used in the spec: nn.Linear(1, 1) on x = [[1..13]] ---
    in_features, out_features = 1, 1
    key = jax.random.PRNGKey(0)
    kw, kb = jax.random.split(key)
    bound = 1.0 / (in_features ** 0.5)
    weight = jax.random.uniform(
        kw, (out_features, in_features), jnp.float32, -bound, bound)
    bias = jax.random.uniform(
        kb, (out_features,), jnp.float32, -bound, bound)

    x = jnp.arange(1.0, 14.0, dtype=jnp.float32).reshape(13, 1)

    y = jax.block_until_ready(linear_reg_forward(x, weight, bias))
    y_ref = x * weight[0, 0] + bias[0]
    assert y.shape == (13, out_features)
    assert jnp.allclose(y, y_ref, atol=1e-6, rtol=1e-6)

    # --- General MXU path, small single-block shape (bf16 + f32 variants) ---
    kx2, kw2, kb2 = jax.random.split(jax.random.PRNGKey(0), 3)
    N2, K2, M2 = 32, 192, 160
    x2 = jax.random.normal(kx2, (N2, K2), jnp.float32)
    w2 = jax.random.normal(kw2, (M2, K2), jnp.float32) * 0.1
    b2 = jax.random.normal(kb2, (M2,), jnp.float32)

    y2 = jax.block_until_ready(linear_reg_forward(x2, w2, b2))
    ref2 = (x2.astype(jnp.bfloat16).astype(jnp.float32)
            @ w2.astype(jnp.bfloat16).astype(jnp.float32).T + b2)
    assert y2.shape == (N2, M2)
    assert jnp.allclose(y2, ref2, atol=1e-2, rtol=1e-2)

    y2f = jax.block_until_ready(
        linear_reg_forward(x2, w2, b2, compute_dtype=jnp.float32))
    assert jnp.allclose(y2f, x2 @ w2.T + b2, atol=2e-2, rtol=2e-2)

    # --- Multi-block + ragged N/M/K edges (exercises the in-kernel K mask) ---
    kx3, kw3, kb3 = jax.random.split(jax.random.PRNGKey(1), 3)
    N3, K3, M3 = 520, 2304, 640
    x3 = jax.random.normal(kx3, (N3, K3), jnp.float32)
    w3 = jax.random.normal(kw3, (M3, K3), jnp.float32) * 0.05
    b3 = jax.random.normal(kb3, (M3,), jnp.float32)

    y3 = jax.block_until_ready(linear_reg_forward(x3, w3, b3))
    ref3 = (x3.astype(jnp.bfloat16).astype(jnp.float32)
            @ w3.astype(jnp.bfloat16).astype(jnp.float32).T + b3)
    assert y3.shape == (N3, M3)
    assert jnp.allclose(y3, ref3, atol=5e-2, rtol=5e-2)

    print("KERNEL_OK")
</pallas_src>

<mosaic_0001>
module attributes {stable_mosaic.version = 11 : i64} {
  func.func @_linear_scalar_kernel(%arg0: i32, %arg1: memref<1xf32, #tpu.memory_space<smem>>, %arg2: memref<1xf32, #tpu.memory_space<smem>>, %arg3: memref<8x128xf32, #tpu.memory_space<vmem>>, %arg4: memref<8x128xf32, #tpu.memory_space<vmem>>) attributes {dimension_semantics = [#tpu.dimension_semantics<parallel>], iteration_bounds = array<i64: 1>, scalar_prefetch = 0 : i64, scratch_operands = 0 : i64, tpu.core_type = #tpu.core_type<tc>, window_params = [{transform_indices = @transform_0, window_bounds = array<i64: 1>}, {transform_indices = @transform_1, window_bounds = array<i64: 1>}, {transform_indices = @transform_2, window_bounds = array<i64: 8, 128>}, {transform_indices = @transform_3, window_bounds = array<i64: 8, 128>}]} {
    %c0 = arith.constant 0 : index
    %c0_0 = arith.constant 0 : index
    %0 = vector.load %arg3[%c0, %c0_0] : memref<8x128xf32, #tpu.memory_space<vmem>>, vector<8x128xf32>
    %c0_1 = arith.constant 0 : index
    %1 = memref.load %arg1[%c0_1] : memref<1xf32, #tpu.memory_space<smem>>
    %2 = vector.broadcast %1 : f32 to vector<8x128xf32>
    %3 = arith.mulf %0, %2 : vector<8x128xf32>
    %c0_2 = arith.constant 0 : index
    %4 = memref.load %arg2[%c0_2] : memref<1xf32, #tpu.memory_space<smem>>
    %5 = vector.broadcast %4 : f32 to vector<8x128xf32>
    %6 = arith.addf %3, %5 : vector<8x128xf32>
    %c0_3 = arith.constant 0 : index
    %c0_4 = arith.constant 0 : index
    %7 = vector.load %arg4[%c0_3, %c0_4] : memref<8x128xf32, #tpu.memory_space<vmem>>, vector<8x128xf32>
    tpu.vector_store %arg4[%c0_3, %c0_4], %6 {strides = array<i32>} : memref<8x128xf32, #tpu.memory_space<vmem>>, vector<8x128xf32>,
    return
  }
  func.func @transform_0(%arg0: i32) -> i32 {
    %c0_i32 = arith.constant 0 : i32
    %c0_i32_0 = arith.constant 0 : i32
    return %c0_i32 : i32
  }
  func.func @transform_1(%arg0: i32) -> i32 {
    %c0_i32 = arith.constant 0 : i32
    %c0_i32_0 = arith.constant 0 : i32
    return %c0_i32 : i32
  }
  func.func @transform_2(%arg0: i32) -> (i32, i32) {
    %c0_i32 = arith.constant 0 : i32
    %c0_i32_0 = arith.constant 0 : i32
    return %arg0, %c0_i32 : i32, i32
  }
  func.func @transform_3(%arg0: i32) -> (i32, i32) {
    %c0_i32 = arith.constant 0 : i32
    %c0_i32_0 = arith.constant 0 : i32
    return %arg0, %c0_i32 : i32, i32
  }
}

</mosaic_0001>

<llo_original>
// kernel: tpu_custom_call.1
$region0: #{tpu_custom_call.1}
  #allocation0 [shape = 'u32[]', space=smem, size = 0x4, offset = 0x4, fixed_abs, tag = 'smem constant byte address 0x4 - core index']
  #allocation1 [shape = 'u32[144,128]{1,0:T(1,128)}', space=vmem, size = 0x12000, scoped, tag = 'internal scratch']
  #allocation2 [shape = 'f32[1]{0:T(128)S(6)}', space=smem, size = 0x200, scoped, tag = 'scoped memory for tpu_custom_call.1']
  #allocation3 [shape = 'f32[1]{0:T(128)S(6)}', space=smem, size = 0x200, scoped, tag = 'scoped memory for tpu_custom_call.1']
  %s0 = inlined_call_operand.<no memory space> [shape: f32[1], index: 0, kind: input, shape index: {}]
  %s1 = inlined_call_operand.<no memory space> [shape: f32[1], index: 1, kind: input, shape index: {}]
  %s2 = inlined_call_operand.hbm [shape: f32[8,128], index: 2, kind: input, shape index: {}]
  %s3 = inlined_call_operand.hbm [shape: f32[8,128], index: 3, kind: output, shape index: {}]
  %s4 = sld [smem:[#allocation0]]
  $region26: #{tpu_custom_call.1} parent=0
    _
  %s6 = ssub.s32 1, %s4
  %s7 = scalar_select 0, %s6, %s4
  %8 = sst [smem:[#allocation2]] %s0
  %9 = sst [smem:[#allocation3]] %s1
  $region1: #{tpu_custom_call.1} parent=0
    #allocation4 [shape = 'u8[4096]{0}', space=vmem, size = 0x1000, scoped, tag = 'input window, operand 2, single buffered']
    #allocation5 [shape = 's32[1]{0}', space=sflag, size = 0x4, scoped, tag = 'scoped memory for tpu_custom_call.1']
    #allocation6 [shape = 's32[1]{0}', space=sflag, size = 0x4, scoped, tag = 'scoped memory for tpu_custom_call.1']
    #allocation7 [shape = 'u8[4096]{0}', space=vmem, size = 0x1000, scoped, tag = 'output window, operand 0, single buffered']
    %10 = vsyncpa [#allocation5], 0
    %11 = vsyncpa [#allocation6], 0
    // Predicated region
    $region2: #{tpu_custom_call.1} parent=1 // pred_check
      _
    $region3: #{tpu_custom_call.1} parent=1 // pred_check_branch
      %13 = sbr.rel (0) target = $region5
    $region4: #{tpu_custom_call.1} parent=1 // pred_region
      _
    $region5: #{tpu_custom_call.1} parent=1 // pred_fallthru
      _
    // Predicated region
    $region6: #{tpu_custom_call.1} parent=1 // pred_check
      _
    $region7: #{tpu_custom_call.1} parent=1 // pred_check_branch
      %15 = sbr.rel (0) target = $region9
    $region8: #{tpu_custom_call.1} parent=1 // pred_region
      _
    $region9: #{tpu_custom_call.1} parent=1 // pred_fallthru
      _
    // Predicated region
    $region10: #{tpu_custom_call.1} parent=1 // pred_check
      _
    $region11: #{tpu_custom_call.1} parent=1 // pred_check_branch
      %17 = sbr.rel (0) target = $region13
    $region12: #{tpu_custom_call.1} parent=1 // pred_region
      %s19 = ssub.s32 128, 128
      %20 = vsyncadd [#allocation5], %s19
      %s22 = sshll.u32 [#allocation4], 4
      %s23 = int_to_ptr.vmem [resolvable:$true] %s22
      %25 = dma.hbm_to_vmem [thread:$0]  %s2, 128, %s23, [#allocation5]
    $region13: #{tpu_custom_call.1} parent=1 // pred_fallthru
      _
    // Predicated region
    $region14: #{tpu_custom_call.1} parent=1 // pred_check
      _
    $region15: #{tpu_custom_call.1} parent=1 // pred_check_branch
      %27 = sbr.rel (0) target = $region17
    $region16: #{tpu_custom_call.1} parent=1 // pred_region
      %28 = dma.done [#allocation5], 128
    $region17: #{tpu_custom_call.1} parent=1 // pred_fallthru
      _
    %v29 = vld [vmem:[#allocation4] sm:$0xff]
    %s30 = sld [smem:[#allocation2]]
    %v31 = vstv %s30
    %v32 = vmul.f32 %v29, %v31
    %s33 = sld [smem:[#allocation3]]
    %v34 = vstv %s33
    %v35 = vadd.f32 %v32, %v34
    %36 = vst [vmem:[#allocation7] sm:$0xff] %v35
    // Predicated region
    $region18: #{tpu_custom_call.1} parent=1 // pred_check
      _
    $region19: #{tpu_custom_call.1} parent=1 // pred_check_branch
      %38 = sbr.rel (0) target = $region21
    $region20: #{tpu_custom_call.1} parent=1 // pred_region
      %s40 = ssub.s32 128, 128
      %41 = vsyncadd [#allocation6], %s40
      %s43 = sshll.u32 [#allocation7], 4
      %s44 = int_to_ptr.vmem [resolvable:$true] %s43
      %46 = dma.vmem_to_hbm [thread:$0]  %s44, 128, %s3, [#allocation6]
    $region21: #{tpu_custom_call.1} parent=1 // pred_fallthru
      _
    // Predicated region
    $region22: #{tpu_custom_call.1} parent=1 // pred_check
      _
    $region23: #{tpu_custom_call.1} parent=1 // pred_check_branch
      %48 = sbr.rel (0) target = $region25
    $region24: #{tpu_custom_call.1} parent=1 // pred_region
      %49 = dma.done [#allocation6], 128
    $region25: #{tpu_custom_call.1} parent=1 // pred_fallthru
      _
    %50 = vsyncpa [#allocation5], 1
    %51 = vsyncpa [#allocation6], 1

</llo_original>
